<compile_context>
chip_gen: v5e
topology: v5e:2x2
jax: 0.10.0
libtpu: 0.0.40
codegen_flags: <defaults>
</compile_context>

<pallas_src>
import jax
import jax.numpy as jnp
from jax.experimental import pallas as pl
from jax.experimental.pallas import tpu as pltpu


def _round_up(x, m):
    return ((x + m - 1) // m) * m


def _make_rope_kernel(r, half):
    """Kernel closure. r = row-fold factor, half = len(inv_freq)."""

    def rope_kernel(t_ref, invf_ref, out_ref):
        # t_ref   : (bg, r)          positions, r consecutive rows folded into lanes
        # invf_ref: (1, half)        inverse frequencies (resident across grid)
        # out_ref : (bg, r*2*half)   folded, lane-dense output block
        tv = t_ref[...]                              # (bg, r)
        invf = invf_ref[...]                         # (1, half)

        if r == 1:
            freqs = tv * invf                        # (bg, half)
            emb = jnp.concatenate([jnp.sin(freqs), jnp.cos(freqs)], axis=-1)
        else:
            # Lane-dense frequencies for all r folded rows: (bg, r*half).
            freqs = jnp.concatenate(
                [tv[:, j:j + 1] * invf for j in range(r)], axis=-1)
            s = jnp.sin(freqs)                       # one sin per element
            c = jnp.cos(freqs)                       # one cos per element
            # Interleave [sin_j | cos_j] per folded row so the wrapper's
            # row-major unfold back to (S, dim) is a free reshape.
            parts = []
            for j in range(r):
                parts.append(s[:, j * half:(j + 1) * half])
                parts.append(c[:, j * half:(j + 1) * half])
            emb = jnp.concatenate(parts, axis=-1)    # (bg, r*dim)

        out_ref[...] = emb.astype(out_ref.dtype)     # full-tile, unmasked store

    return rope_kernel


def rotary_positional_encoding(t, inv_freq, *, block_rows=512, target_lanes=512):
    """t: [S] positions (float), inv_freq: [dim//2]. Returns [S, dim] float32."""
    S = int(t.shape[0])
    half = int(inv_freq.shape[0])
    dim = 2 * half

    # Row-fold factor: pack r consecutive output rows into lanes so every store
    # is a >=512-lane (multiple of 128) unmasked vst even when dim < 128.
    r = 1
    while r * dim < target_lanes and r < 64:
        r *= 2
    L = r * dim                                      # folded lane width

    G = -(-S // r)                                   # ceil(S / r) folded rows
    bg = min(block_rows, _round_up(G, 8))            # sublane-aligned block height
    G_pad = _round_up(G, bg)
    S_pad = G_pad * r

    t_f = jnp.pad(t.astype(jnp.float32), (0, S_pad - S)).reshape(G_pad, r)
    invf = inv_freq.astype(jnp.float32).reshape(1, half)

    grid = (G_pad // bg,)
    out_f = pl.pallas_call(
        _make_rope_kernel(r, half),
        out_shape=jax.ShapeDtypeStruct((G_pad, L), jnp.float32),
        grid=grid,
        in_specs=[
            pl.BlockSpec((bg, r), lambda i: (i, 0)),     # positions: blocked over folded rows
            pl.BlockSpec((1, half), lambda i: (0, 0)),   # inv_freq: resident
        ],
        out_specs=pl.BlockSpec((bg, L), lambda i: (i, 0)),
        compiler_params=pltpu.CompilerParams(
            dimension_semantics=("parallel",),           # megacore-shard S on v7x
            vmem_limit_bytes=32 * 1024 * 1024,           # safe on v5e/v6e/v7x
        ),
    )(t_f, invf)

    # Row-major unfold back to (S_pad, dim) is a free (contiguous) reshape;
    # then drop the padding rows.
    return out_f.reshape(S_pad, dim)[:S]


if __name__ == "__main__":
    dim = 32        # embedding dim -> inv_freq has dim//2 = 16 entries
    seq = 8         # number of positions

    # Deterministic parameter (same as the PyTorch buffer)
    inv_freq = 1.0 / (10000.0 ** (jnp.arange(0, dim, 2, dtype=jnp.float32) / dim))

    # Deterministic example input positions
    key = jax.random.PRNGKey(0)
    t = jax.random.uniform(key, (seq,), dtype=jnp.float32) * 100.0

    emb = rotary_positional_encoding(t, inv_freq)
    emb = jax.block_until_ready(emb)

    # Pure-JAX reference for sanity
    freqs_ref = t[:, None] * inv_freq[None, :]
    emb_ref = jnp.concatenate([jnp.sin(freqs_ref), jnp.cos(freqs_ref)], axis=-1)
    assert emb.shape == (seq, dim)
    assert jnp.allclose(emb, emb_ref, atol=1e-5, rtol=1e-5)

    print("KERNEL_OK")
</pallas_src>

<mosaic_0001>
module attributes {stable_mosaic.version = 11 : i64} {
  func.func @rope_kernel(%arg0: i32, %arg1: memref<8x16xf32, #tpu.memory_space<vmem>>, %arg2: memref<1x16xf32, #tpu.memory_space<vmem>>, %arg3: memref<8x512xf32, #tpu.memory_space<vmem>>) attributes {dimension_semantics = [#tpu.dimension_semantics<parallel>], iteration_bounds = array<i64: 1>, scalar_prefetch = 0 : i64, scratch_operands = 0 : i64, tpu.core_type = #tpu.core_type<tc>, window_params = [{transform_indices = @transform_0, window_bounds = array<i64: 8, 16>}, {pipeline_mode = #tpu.pipeline_mode<synchronous>, transform_indices = @transform_1, window_bounds = array<i64: 1, 16>}, {transform_indices = @transform_2, window_bounds = array<i64: 8, 512>}]} {
    %c0 = arith.constant 0 : index
    %c0_0 = arith.constant 0 : index
    %0 = vector.load %arg1[%c0, %c0_0] : memref<8x16xf32, #tpu.memory_space<vmem>>, vector<8x16xf32>
    %c0_1 = arith.constant 0 : index
    %c0_2 = arith.constant 0 : index
    %1 = vector.load %arg2[%c0_1, %c0_2] : memref<1x16xf32, #tpu.memory_space<vmem>>, vector<1x16xf32>
    %2 = vector.extract_strided_slice %0 {offsets = [0, 0], sizes = [8, 1], strides = [1, 1]} : vector<8x16xf32> to vector<8x1xf32>
    %3 = vector.broadcast %2 : vector<8x1xf32> to vector<8x16xf32>
    %4 = vector.broadcast %1 : vector<1x16xf32> to vector<8x16xf32>
    %5 = arith.mulf %3, %4 : vector<8x16xf32>
    %6 = vector.extract_strided_slice %0 {offsets = [0, 1], sizes = [8, 1], strides = [1, 1]} : vector<8x16xf32> to vector<8x1xf32>
    %7 = vector.broadcast %6 : vector<8x1xf32> to vector<8x16xf32>
    %8 = vector.broadcast %1 : vector<1x16xf32> to vector<8x16xf32>
    %9 = arith.mulf %7, %8 : vector<8x16xf32>
    %10 = vector.extract_strided_slice %0 {offsets = [0, 2], sizes = [8, 1], strides = [1, 1]} : vector<8x16xf32> to vector<8x1xf32>
    %11 = vector.broadcast %10 : vector<8x1xf32> to vector<8x16xf32>
    %12 = vector.broadcast %1 : vector<1x16xf32> to vector<8x16xf32>
    %13 = arith.mulf %11, %12 : vector<8x16xf32>
    %14 = vector.extract_strided_slice %0 {offsets = [0, 3], sizes = [8, 1], strides = [1, 1]} : vector<8x16xf32> to vector<8x1xf32>
    %15 = vector.broadcast %14 : vector<8x1xf32> to vector<8x16xf32>
    %16 = vector.broadcast %1 : vector<1x16xf32> to vector<8x16xf32>
    %17 = arith.mulf %15, %16 : vector<8x16xf32>
    %18 = vector.extract_strided_slice %0 {offsets = [0, 4], sizes = [8, 1], strides = [1, 1]} : vector<8x16xf32> to vector<8x1xf32>
    %19 = vector.broadcast %18 : vector<8x1xf32> to vector<8x16xf32>
    %20 = vector.broadcast %1 : vector<1x16xf32> to vector<8x16xf32>
    %21 = arith.mulf %19, %20 : vector<8x16xf32>
    %22 = vector.extract_strided_slice %0 {offsets = [0, 5], sizes = [8, 1], strides = [1, 1]} : vector<8x16xf32> to vector<8x1xf32>
    %23 = vector.broadcast %22 : vector<8x1xf32> to vector<8x16xf32>
    %24 = vector.broadcast %1 : vector<1x16xf32> to vector<8x16xf32>
    %25 = arith.mulf %23, %24 : vector<8x16xf32>
    %26 = vector.extract_strided_slice %0 {offsets = [0, 6], sizes = [8, 1], strides = [1, 1]} : vector<8x16xf32> to vector<8x1xf32>
    %27 = vector.broadcast %26 : vector<8x1xf32> to vector<8x16xf32>
    %28 = vector.broadcast %1 : vector<1x16xf32> to vector<8x16xf32>
    %29 = arith.mulf %27, %28 : vector<8x16xf32>
    %30 = vector.extract_strided_slice %0 {offsets = [0, 7], sizes = [8, 1], strides = [1, 1]} : vector<8x16xf32> to vector<8x1xf32>
    %31 = vector.broadcast %30 : vector<8x1xf32> to vector<8x16xf32>
    %32 = vector.broadcast %1 : vector<1x16xf32> to vector<8x16xf32>
    %33 = arith.mulf %31, %32 : vector<8x16xf32>
    %34 = vector.extract_strided_slice %0 {offsets = [0, 8], sizes = [8, 1], strides = [1, 1]} : vector<8x16xf32> to vector<8x1xf32>
    %35 = vector.broadcast %34 : vector<8x1xf32> to vector<8x16xf32>
    %36 = vector.broadcast %1 : vector<1x16xf32> to vector<8x16xf32>
    %37 = arith.mulf %35, %36 : vector<8x16xf32>
    %38 = vector.extract_strided_slice %0 {offsets = [0, 9], sizes = [8, 1], strides = [1, 1]} : vector<8x16xf32> to vector<8x1xf32>
    %39 = vector.broadcast %38 : vector<8x1xf32> to vector<8x16xf32>
    %40 = vector.broadcast %1 : vector<1x16xf32> to vector<8x16xf32>
    %41 = arith.mulf %39, %40 : vector<8x16xf32>
    %42 = vector.extract_strided_slice %0 {offsets = [0, 10], sizes = [8, 1], strides = [1, 1]} : vector<8x16xf32> to vector<8x1xf32>
    %43 = vector.broadcast %42 : vector<8x1xf32> to vector<8x16xf32>
    %44 = vector.broadcast %1 : vector<1x16xf32> to vector<8x16xf32>
    %45 = arith.mulf %43, %44 : vector<8x16xf32>
    %46 = vector.extract_strided_slice %0 {offsets = [0, 11], sizes = [8, 1], strides = [1, 1]} : vector<8x16xf32> to vector<8x1xf32>
    %47 = vector.broadcast %46 : vector<8x1xf32> to vector<8x16xf32>
    %48 = vector.broadcast %1 : vector<1x16xf32> to vector<8x16xf32>
    %49 = arith.mulf %47, %48 : vector<8x16xf32>
    %50 = vector.extract_strided_slice %0 {offsets = [0, 12], sizes = [8, 1], strides = [1, 1]} : vector<8x16xf32> to vector<8x1xf32>
    %51 = vector.broadcast %50 : vector<8x1xf32> to vector<8x16xf32>
    %52 = vector.broadcast %1 : vector<1x16xf32> to vector<8x16xf32>
    %53 = arith.mulf %51, %52 : vector<8x16xf32>
    %54 = vector.extract_strided_slice %0 {offsets = [0, 13], sizes = [8, 1], strides = [1, 1]} : vector<8x16xf32> to vector<8x1xf32>
    %55 = vector.broadcast %54 : vector<8x1xf32> to vector<8x16xf32>
    %56 = vector.broadcast %1 : vector<1x16xf32> to vector<8x16xf32>
    %57 = arith.mulf %55, %56 : vector<8x16xf32>
    %58 = vector.extract_strided_slice %0 {offsets = [0, 14], sizes = [8, 1], strides = [1, 1]} : vector<8x16xf32> to vector<8x1xf32>
    %59 = vector.broadcast %58 : vector<8x1xf32> to vector<8x16xf32>
    %60 = vector.broadcast %1 : vector<1x16xf32> to vector<8x16xf32>
    %61 = arith.mulf %59, %60 : vector<8x16xf32>
    %62 = vector.extract_strided_slice %0 {offsets = [0, 15], sizes = [8, 1], strides = [1, 1]} : vector<8x16xf32> to vector<8x1xf32>
    %63 = vector.broadcast %62 : vector<8x1xf32> to vector<8x16xf32>
    %64 = vector.broadcast %1 : vector<1x16xf32> to vector<8x16xf32>
    %65 = arith.mulf %63, %64 : vector<8x16xf32>
    %66 = tpu.concatenate %5, %9, %13, %17, %21, %25, %29, %33, %37, %41, %45, %49, %53, %57, %61, %65 in 1 : vector<8x16xf32>, vector<8x16xf32>, vector<8x16xf32>, vector<8x16xf32>, vector<8x16xf32>, vector<8x16xf32>, vector<8x16xf32>, vector<8x16xf32>, vector<8x16xf32>, vector<8x16xf32>, vector<8x16xf32>, vector<8x16xf32>, vector<8x16xf32>, vector<8x16xf32>, vector<8x16xf32>, vector<8x16xf32> -> vector<8x256xf32>
    %67 = math.sin %66 : vector<8x256xf32>
    %68 = math.cos %66 : vector<8x256xf32>
    %69 = vector.extract_strided_slice %67 {offsets = [0, 0], sizes = [8, 16], strides = [1, 1]} : vector<8x256xf32> to vector<8x16xf32>
    %70 = vector.extract_strided_slice %68 {offsets = [0, 0], sizes = [8, 16], strides = [1, 1]} : vector<8x256xf32> to vector<8x16xf32>
    %71 = vector.extract_strided_slice %67 {offsets = [0, 16], sizes = [8, 16], strides = [1, 1]} : vector<8x256xf32> to vector<8x16xf32>
    %72 = vector.extract_strided_slice %68 {offsets = [0, 16], sizes = [8, 16], strides = [1, 1]} : vector<8x256xf32> to vector<8x16xf32>
    %73 = vector.extract_strided_slice %67 {offsets = [0, 32], sizes = [8, 16], strides = [1, 1]} : vector<8x256xf32> to vector<8x16xf32>
    %74 = vector.extract_strided_slice %68 {offsets = [0, 32], sizes = [8, 16], strides = [1, 1]} : vector<8x256xf32> to vector<8x16xf32>
    %75 = vector.extract_strided_slice %67 {offsets = [0, 48], sizes = [8, 16], strides = [1, 1]} : vector<8x256xf32> to vector<8x16xf32>
    %76 = vector.extract_strided_slice %68 {offsets = [0, 48], sizes = [8, 16], strides = [1, 1]} : vector<8x256xf32> to vector<8x16xf32>
    %77 = vector.extract_strided_slice %67 {offsets = [0, 64], sizes = [8, 16], strides = [1, 1]} : vector<8x256xf32> to vector<8x16xf32>
    %78 = vector.extract_strided_slice %68 {offsets = [0, 64], sizes = [8, 16], strides = [1, 1]} : vector<8x256xf32> to vector<8x16xf32>
    %79 = vector.extract_strided_slice %67 {offsets = [0, 80], sizes = [8, 16], strides = [1, 1]} : vector<8x256xf32> to vector<8x16xf32>
    %80 = vector.extract_strided_slice %68 {offsets = [0, 80], sizes = [8, 16], strides = [1, 1]} : vector<8x256xf32> to vector<8x16xf32>
    %81 = vector.extract_strided_slice %67 {offsets = [0, 96], sizes = [8, 16], strides = [1, 1]} : vector<8x256xf32> to vector<8x16xf32>
    %82 = vector.extract_strided_slice %68 {offsets = [0, 96], sizes = [8, 16], strides = [1, 1]} : vector<8x256xf32> to vector<8x16xf32>
    %83 = vector.extract_strided_slice %67 {offsets = [0, 112], sizes = [8, 16], strides = [1, 1]} : vector<8x256xf32> to vector<8x16xf32>
    %84 = vector.extract_strided_slice %68 {offsets = [0, 112], sizes = [8, 16], strides = [1, 1]} : vector<8x256xf32> to vector<8x16xf32>
    %85 = vector.extract_strided_slice %67 {offsets = [0, 128], sizes = [8, 16], strides = [1, 1]} : vector<8x256xf32> to vector<8x16xf32>
    %86 = vector.extract_strided_slice %68 {offsets = [0, 128], sizes = [8, 16], strides = [1, 1]} : vector<8x256xf32> to vector<8x16xf32>
    %87 = vector.extract_strided_slice %67 {offsets = [0, 144], sizes = [8, 16], strides = [1, 1]} : vector<8x256xf32> to vector<8x16xf32>
    %88 = vector.extract_strided_slice %68 {offsets = [0, 144], sizes = [8, 16], strides = [1, 1]} : vector<8x256xf32> to vector<8x16xf32>
    %89 = vector.extract_strided_slice %67 {offsets = [0, 160], sizes = [8, 16], strides = [1, 1]} : vector<8x256xf32> to vector<8x16xf32>
    %90 = vector.extract_strided_slice %68 {offsets = [0, 160], sizes = [8, 16], strides = [1, 1]} : vector<8x256xf32> to vector<8x16xf32>
    %91 = vector.extract_strided_slice %67 {offsets = [0, 176], sizes = [8, 16], strides = [1, 1]} : vector<8x256xf32> to vector<8x16xf32>
    %92 = vector.extract_strided_slice %68 {offsets = [0, 176], sizes = [8, 16], strides = [1, 1]} : vector<8x256xf32> to vector<8x16xf32>
    %93 = vector.extract_strided_slice %67 {offsets = [0, 192], sizes = [8, 16], strides = [1, 1]} : vector<8x256xf32> to vector<8x16xf32>
    %94 = vector.extract_strided_slice %68 {offsets = [0, 192], sizes = [8, 16], strides = [1, 1]} : vector<8x256xf32> to vector<8x16xf32>
    %95 = vector.extract_strided_slice %67 {offsets = [0, 208], sizes = [8, 16], strides = [1, 1]} : vector<8x256xf32> to vector<8x16xf32>
    %96 = vector.extract_strided_slice %68 {offsets = [0, 208], sizes = [8, 16], strides = [1, 1]} : vector<8x256xf32> to vector<8x16xf32>
    %97 = vector.extract_strided_slice %67 {offsets = [0, 224], sizes = [8, 16], strides = [1, 1]} : vector<8x256xf32> to vector<8x16xf32>
    %98 = vector.extract_strided_slice %68 {offsets = [0, 224], sizes = [8, 16], strides = [1, 1]} : vector<8x256xf32> to vector<8x16xf32>
    %99 = vector.extract_strided_slice %67 {offsets = [0, 240], sizes = [8, 16], strides = [1, 1]} : vector<8x256xf32> to vector<8x16xf32>
    %100 = vector.extract_strided_slice %68 {offsets = [0, 240], sizes = [8, 16], strides = [1, 1]} : vector<8x256xf32> to vector<8x16xf32>
    %101 = tpu.concatenate %69, %70, %71, %72, %73, %74, %75, %76, %77, %78, %79, %80, %81, %82, %83, %84 in 1 : vector<8x16xf32>, vector<8x16xf32>, vector<8x16xf32>, vector<8x16xf32>, vector<8x16xf32>, vector<8x16xf32>, vector<8x16xf32>, vector<8x16xf32>, vector<8x16xf32>, vector<8x16xf32>, vector<8x16xf32>, vector<8x16xf32>, vector<8x16xf32>, vector<8x16xf32>, vector<8x16xf32>, vector<8x16xf32> -> vector<8x256xf32>
    %102 = tpu.concatenate %85, %86, %87, %88, %89, %90, %91, %92, %93, %94, %95, %96, %97, %98, %99, %100 in 1 : vector<8x16xf32>, vector<8x16xf32>, vector<8x16xf32>, vector<8x16xf32>, vector<8x16xf32>, vector<8x16xf32>, vector<8x16xf32>, vector<8x16xf32>, vector<8x16xf32>, vector<8x16xf32>, vector<8x16xf32>, vector<8x16xf32>, vector<8x16xf32>, vector<8x16xf32>, vector<8x16xf32>, vector<8x16xf32> -> vector<8x256xf32>
    %103 = tpu.concatenate %101, %102 in 1 : vector<8x256xf32>, vector<8x256xf32> -> vector<8x512xf32>
    %c0_3 = arith.constant 0 : index
    %c0_4 = arith.constant 0 : index
    %104 = vector.load %arg3[%c0_3, %c0_4] : memref<8x512xf32, #tpu.memory_space<vmem>>, vector<8x512xf32>
    tpu.vector_store %arg3[%c0_3, %c0_4], %103 {strides = array<i32>} : memref<8x512xf32, #tpu.memory_space<vmem>>, vector<8x512xf32>,
    return
  }
  func.func @transform_0(%arg0: i32) -> (i32, i32) {
    %c0_i32 = arith.constant 0 : i32
    %c0_i32_0 = arith.constant 0 : i32
    return %arg0, %c0_i32 : i32, i32
  }
  func.func @transform_1(%arg0: i32) -> (i32, i32) {
    %c0_i32 = arith.constant 0 : i32
    %c0_i32_0 = arith.constant 0 : i32
    %c0_i32_1 = arith.constant 0 : i32
    return %c0_i32, %c0_i32_0 : i32, i32
  }
  func.func @transform_2(%arg0: i32) -> (i32, i32) {
    %c0_i32 = arith.constant 0 : i32
    %c0_i32_0 = arith.constant 0 : i32
    return %arg0, %c0_i32 : i32, i32
  }
}

</mosaic_0001>

<llo_original>
// kernel: tpu_custom_call.1
$region0: #{tpu_custom_call.1}
  #allocation0 [shape = 'u32[]', space=smem, size = 0x4, offset = 0x4, fixed_abs, tag = 'smem constant byte address 0x4 - core index']
  #allocation1 [shape = 'u32[72,128]{1,0:T(1,128)}', space=vmem, size = 0x9000, scoped, tag = 'internal scratch']
  %s0 = inlined_call_operand.hbm [shape: f32[8,16], index: 0, kind: input, shape index: {}]
  %s1 = inlined_call_operand.hbm [shape: f32[1,16], index: 1, kind: input, shape index: {}]
  %s2 = inlined_call_operand.hbm [shape: f32[8,512], index: 2, kind: output, shape index: {}]
  %s3 = sld [smem:[#allocation0]]
  $region26: #{tpu_custom_call.1} parent=0
    _
  %s5 = ssub.s32 1, %s3
  %s6 = scalar_select 0, %s5, %s3
  $region1: #{tpu_custom_call.1} parent=0
    #allocation2 [shape = 'u8[4096]{0}', space=vmem, size = 0x1000, scoped, tag = 'input window, operand 0, single buffered']
    #allocation3 [shape = 's32[1]{0}', space=sflag, size = 0x4, scoped, tag = 'scoped memory for tpu_custom_call.1']
    #allocation4 [shape = 's32[1]{0}', space=sflag, size = 0x4, scoped, tag = 'scoped memory for tpu_custom_call.1']
    #allocation5 [shape = 'u8[512]{0}', space=vmem, size = 0x400, scoped, tag = 'input window, operand 1, single buffered']
    #allocation6 [shape = 's32[1]{0}', space=sflag, size = 0x4, scoped, tag = 'scoped memory for tpu_custom_call.1']
    #allocation7 [shape = 'u8[16384]{0}', space=vmem, size = 0x4000, scoped, tag = 'output window, operand 0, single buffered']
    %7 = vsyncpa [#allocation3], 0
    %8 = vsyncpa [#allocation6], 0
    %9 = vsyncpa [#allocation4], 0
    // Predicated region
    $region2: #{tpu_custom_call.1} parent=1 // pred_check
      _
    $region3: #{tpu_custom_call.1} parent=1 // pred_check_branch
      %11 = sbr.rel (0) target = $region5
    $region4: #{tpu_custom_call.1} parent=1 // pred_region
      %13 = vsyncadd [#allocation3], 0
      %s15 = sshll.u32 %s0, 4
      %s16 = int_to_ptr.hbm [resolvable:$true] %s15
      %s17 = sshll.u32 [#allocation2], 4
      %s18 = int_to_ptr.vmem [resolvable:$true] %s17
      %20 = dma.hbm_to_vmem [thread:$0]  %s16, 128, %s18, [#allocation3]
    $region5: #{tpu_custom_call.1} parent=1 // pred_fallthru
      _
    // Predicated region
    $region6: #{tpu_custom_call.1} parent=1 // pred_check
      _
    $region7: #{tpu_custom_call.1} parent=1 // pred_check_branch
      %22 = sbr.rel (0) target = $region9
    $region8: #{tpu_custom_call.1} parent=1 // pred_region
      %24 = vsyncadd [#allocation6], 0
      %s26 = sshll.u32 %s1, 4
      %s27 = int_to_ptr.hbm [resolvable:$true] %s26
      %s28 = sshll.u32 [#allocation5], 4
      %s29 = int_to_ptr.vmem [resolvable:$true] %s28
      %31 = dma.hbm_to_vmem [thread:$0]  %s27, 16, %s29, [#allocation6]
    $region9: #{tpu_custom_call.1} parent=1 // pred_fallthru
      _
    // Predicated region
    $region10: #{tpu_custom_call.1} parent=1 // pred_check
      _
    $region11: #{tpu_custom_call.1} parent=1 // pred_check_branch
      %33 = sbr.rel (0) target = $region13
    $region12: #{tpu_custom_call.1} parent=1 // pred_region
      %35 = dma.done [#allocation3], 128
    $region13: #{tpu_custom_call.1} parent=1 // pred_fallthru
      _
    // Predicated region
    $region14: #{tpu_custom_call.1} parent=1 // pred_check
      _
    $region15: #{tpu_custom_call.1} parent=1 // pred_check_branch
      %37 = sbr.rel (0) target = $region17
    $region16: #{tpu_custom_call.1} parent=1 // pred_region
      %39 = dma.done [#allocation6], 16
    $region17: #{tpu_custom_call.1} parent=1 // pred_fallthru
      _
    %v40 = vld [vmem:[#allocation2] sm:$0xff]
    %v41 = vld [vmem:[#allocation5] sm:$0x1]
    %43 = vset.pattern.permute.xlu0 0
    %44 = vperm.xlu0 %43, %v40
    %v45 = vpop.permute.xlu0 %44
    %v48 = vperm.slane %v41, 0
    %v50 = vmul.f32 %v45, %v48
    %51 = vset.pattern.permute.xlu0 1
    %52 = vperm.xlu0 %51, %v40
    %v53 = vpop.permute.xlu0 %52
    %v55 = vmul.f32 %v53, %v48
    %56 = vset.pattern.permute.xlu0 2
    %57 = vperm.xlu0 %56, %v40
    %v58 = vpop.permute.xlu0 %57
    %v60 = vmul.f32 %v58, %v48
    %61 = vset.pattern.permute.xlu0 3
    %62 = vperm.xlu0 %61, %v40
    %v63 = vpop.permute.xlu0 %62
    %v65 = vmul.f32 %v63, %v48
    %66 = vset.pattern.permute.xlu0 4
    %67 = vperm.xlu0 %66, %v40
    %v68 = vpop.permute.xlu0 %67
    %v70 = vmul.f32 %v68, %v48
    %71 = vset.pattern.permute.xlu0 5
    %72 = vperm.xlu0 %71, %v40
    %v73 = vpop.permute.xlu0 %72
    %v75 = vmul.f32 %v73, %v48
    %76 = vset.pattern.permute.xlu0 6
    %77 = vperm.xlu0 %76, %v40
    %v78 = vpop.permute.xlu0 %77
    %v80 = vmul.f32 %v78, %v48
    %81 = vset.pattern.permute.xlu0 7
    %82 = vperm.xlu0 %81, %v40
    %v83 = vpop.permute.xlu0 %82
    %v85 = vmul.f32 %v83, %v48
    %86 = vset.pattern.permute.xlu0 8
    %87 = vperm.xlu0 %86, %v40
    %v88 = vpop.permute.xlu0 %87
    %v90 = vmul.f32 %v88, %v48
    %91 = vset.pattern.permute.xlu0 9
    %92 = vperm.xlu0 %91, %v40
    %v93 = vpop.permute.xlu0 %92
    %v95 = vmul.f32 %v93, %v48
    %96 = vset.pattern.permute.xlu0 10
    %97 = vperm.xlu0 %96, %v40
    %v98 = vpop.permute.xlu0 %97
    %v100 = vmul.f32 %v98, %v48
    %101 = vset.pattern.permute.xlu0 11
    %102 = vperm.xlu0 %101, %v40
    %v103 = vpop.permute.xlu0 %102
    %v105 = vmul.f32 %v103, %v48
    %106 = vset.pattern.permute.xlu0 12
    %107 = vperm.xlu0 %106, %v40
    %v108 = vpop.permute.xlu0 %107
    %v110 = vmul.f32 %v108, %v48
    %111 = vset.pattern.permute.xlu0 13
    %112 = vperm.xlu0 %111, %v40
    %v113 = vpop.permute.xlu0 %112
    %v115 = vmul.f32 %v113, %v48
    %116 = vset.pattern.permute.xlu0 14
    %117 = vperm.xlu0 %116, %v40
    %v118 = vpop.permute.xlu0 %117
    %v120 = vmul.f32 %v118, %v48
    %121 = vset.pattern.permute.xlu0 15
    %122 = vperm.xlu0 %121, %v40
    %v123 = vpop.permute.xlu0 %122
    %v125 = vmul.f32 %v123, %v48
    %127 = vrot.lane.b32.xlu0 %v55, 16
    %v128 = vpop.permute.xlu0 %127
    %131 = vrot.lane.b32.xlu0 %v60, 32
    %v132 = vpop.permute.xlu0 %131
    %135 = vrot.lane.b32.xlu0 %v65, 48
    %v136 = vpop.permute.xlu0 %135
    %139 = vrot.lane.b32.xlu0 %v70, 64
    %v140 = vpop.permute.xlu0 %139
    %143 = vrot.lane.b32.xlu0 %v75, 80
    %v144 = vpop.permute.xlu0 %143
    %147 = vrot.lane.b32.xlu0 %v80, 96
    %v148 = vpop.permute.xlu0 %147
    %151 = vrot.lane.b32.xlu0 %v85, 112
    %v152 = vpop.permute.xlu0 %151
    %155 = vrot.lane.b32.xlu0 %v95, 16
    %v156 = vpop.permute.xlu0 %155
    %159 = vrot.lane.b32.xlu0 %v100, 32
    %v160 = vpop.permute.xlu0 %159
    %163 = vrot.lane.b32.xlu0 %v105, 48
    %v164 = vpop.permute.xlu0 %163
    %167 = vrot.lane.b32.xlu0 %v110, 64
    %v168 = vpop.permute.xlu0 %167
    %171 = vrot.lane.b32.xlu0 %v115, 80
    %v172 = vpop.permute.xlu0 %171
    %175 = vrot.lane.b32.xlu0 %v120, 96
    %v176 = vpop.permute.xlu0 %175
    %179 = vrot.lane.b32.xlu0 %v125, 112
    %v180 = vpop.permute.xlu0 %179
    %vm182 = vcmask 130048
    %v183 = vsel %vm182, %v50, %v128
    %vm184 = vcmask 261120
    %v185 = vsel %vm184, %v183, %v132
    %vm186 = vcmask 392192
    %v187 = vsel %vm186, %v185, %v136
    %vm188 = vcmask 523264
    %v189 = vsel %vm188, %v187, %v140
    %vm190 = vcmask 654336
    %v191 = vsel %vm190, %v189, %v144
    %vm192 = vcmask 785408
    %v193 = vsel %vm192, %v191, %v148
    %vm194 = vcmask 916480
    %v195 = vsel %vm194, %v193, %v152
    %v196 = vsel %vm182, %v90, %v156
    %v197 = vsel %vm184, %v196, %v160
    %v198 = vsel %vm186, %v197, %v164
    %v199 = vsel %vm188, %v198, %v168
    %v200 = vsel %vm190, %v199, %v172
    %v201 = vsel %vm192, %v200, %v176
    %v202 = vsel %vm194, %v201, %v180
    %v203 = vand.u32 2147483647, %v195
    %vm204 = vcmp.le.f32.partialorder %v203, 0.7853982
    %vm205 = vcmp.lt.s32.totalorder %v195, 0
    %v206 = vand.u32 %v195, 2139095040
    %v207 = vshrl.u32 %v206, 23
    %v208 = vsub.s32 %v207, 127
    %v209 = vand.u32 2147483647, %v195
    %v210 = vand.u32 %v209, 8388607
    %v211 = vor.u32 %v210, 8388608
    %v212 = vsub.s32 0, %v211
    %v213 = vadd.s32 %v208, 1
    %vm214 = vcmp.gt.s32.totalorder %v213, 0
    %v215 = vsel %vm214, %v213, 0
    %v216 = vshrl.u32 %v215, 5
    %v217 = vand.u32 %v215, 31
    %v218 = vsub.s32 32, %v217
    %v219 = vshrl.u32 683565275, %v218
    %v220 = vshll.u32 683565275, %v217
    %v221 = vshrl.u32 2475754826, %v218
    %v222 = vor.u32 %v220, %v221
    %v223 = vshll.u32 2475754826, %v217
    %v224 = vshrl.u32 2131351028, %v218
    %v225 = vor.u32 %v223, %v224
    %v226 = vshll.u32 2131351028, %v217
    %v227 = vshrl.u32 2102212464, %v218
    %v228 = vor.u32 %v226, %v227
    %v229 = vshll.u32 2102212464, %v217
    %v230 = vshrl.u32 920167782, %v218
    %v231 = vor.u32 %v229, %v230
    %v232 = vshll.u32 920167782, %v217
    %v233 = vshrl.u32 1326507024, %v218
    %v234 = vor.u32 %v232, %v233
    %vm235 = vcmp.lt.s32.totalorder %v216, 1
    %vm236 = vcmp.lt.s32.totalorder %v216, 2
    %vm237 = vcmp.lt.s32.totalorder %v216, 3
    %vm238 = vcmp.lt.s32.totalorder %v216, 4
    %v239 = vsel %vm235, %v219, %v222
    %v240 = vsel %vm238, %v228, 2102212464
    %v241 = vsel %vm237, %v225, %v240
    %v242 = vsel %vm236, %v239, %v241
    %v243 = vsel %vm235, %v222, %v225
    %v244 = vsel %vm238, %v231, 920167782
    %v245 = vsel %vm237, %v228, %v244
    %v246 = vsel %vm236, %v243, %v245
    %v247 = vsel %vm235, %v225, %v228
    %v248 = vsel %vm238, %v234, 1326507024
    %v249 = vsel %vm237, %v231, %v248
    %v250 = vsel %vm236, %v247, %v249
    %v251 = vshll.u32 %v211, 8
    %v252 = vand.u32 %v251, 65535
    %v253 = vshrl.u32 %v251, 16
    %v254 = vand.u32 %v250, 65535
    %v255 = vshrl.u32 %v250, 16
    %v256 = vmul.u32 %v252, %v254
    %v257 = vmul.u32 %v252, %v255
    %v258 = vmul.u32 %v253, %v254
    %v259 = vmul.u32 %v253, %v255
    %v260 = vshll.u32 %v257, 16
    %v261 = vshrl.u32 %v257, 16
    %v262 = vshll.u32 %v258, 16
    %v263 = vshrl.u32 %v258, 16
    %vm264 = vc.u32 %v256, %v260
    %v265 = vsel %vm264, 1, 0
    %v266 = vadd.s32 %v256, %v260
    %v267 = vadd.s32 %v259, %v265
    %vm268 = vc.u32 %v266, %v262
    %v269 = vsel %vm268, 1, 0
    %v270 = vadd.s32 %v266, %v262
    %v271 = vadd.s32 %v267, %v269
    %v272 = vadd.s32 %v271, %v261
    %v273 = vadd.s32 %v272, %v263
    %v274 = vand.u32 %v251, 65535
    %v275 = vshrl.u32 %v251, 16
    %v276 = vand.u32 %v246, 65535
    %v277 = vshrl.u32 %v246, 16
    %v278 = vmul.u32 %v274, %v276
    %v279 = vmul.u32 %v274, %v277
    %v280 = vmul.u32 %v275, %v276
    %v281 = vmul.u32 %v275, %v277
    %v282 = vshll.u32 %v279, 16
    %v283 = vshrl.u32 %v279, 16
    %v284 = vshll.u32 %v280, 16
    %v285 = vshrl.u32 %v280, 16
    %vm286 = vc.u32 %v278, %v282
    %v287 = vsel %vm286, 1, 0
    %v288 = vadd.s32 %v278, %v282
    %v289 = vadd.s32 %v281, %v287
    %vm290 = vc.u32 %v288, %v284
    %v291 = vsel %vm290, 1, 0
    %v292 = vadd.s32 %v288, %v284
    %v293 = vadd.s32 %v289, %v291
    %v294 = vadd.s32 %v293, %v283
    %v295 = vadd.s32 %v294, %v285
    %v296 = vmul.u32 %v251, %v242
    %v297 = vadd.s32 %v273, %v292
    %vm298 = vc.u32 %v273, %v292
    %v299 = vadd.s32 %v295, 1
    %v300 = vsel %vm298, %v299, %v295
    %v301 = vadd.s32 %v296, %v300
    %v302 = vadd.s32 %v301, 536870912
    %v303 = vshrl.u32 %v302, 30
    %v304 = vshll.u32 %v303, 30
    %v305 = vsub.s32 %v301, %v304
    %vm306 = vcmp.lt.s32.totalorder %v305, 0
    %v307 = vsub.s32 0, %v305
    %v308 = vsel %vm306, %v307, %v305
    %v309 = vclz %v308
    %v310 = vsub.s32 %v309, 2
    %vm311 = vcmp.gt.s32.totalorder 0, %v310
    %v312 = vsel %vm311, 0, %v310
    %v313 = vsub.s32 32, %v312
    %v314 = vshll.u32 %v305, %v312
    %v315 = vshrl.u32 %v297, %v313
    %v316 = vor.u32 %v314, %v315
    %v317 = vsub.s32 4294967266, %v312
    %v318 = vadd.s32 %v317, 127
    %v319 = vshll.u32 %v318, 23
    %v320 = vor.u32 4788187, %v319
    %v321 = vand.u32 2147483647, %v320
    %v323 = vcvt.s32.f32 %v316
    %v324 = vmul.f32 %v323, %v321
    %v325 = vxor.u32 %v324, 2147483648
    %v326 = vsel %vm205, %v325, %v324
    %v327 = vsub.s32 4, %v303
    %v328 = vsel %vm205, %v327, %v303
    %v329 = vsel %vm204, %v195, %v326
    %v330 = vsel %vm204, 0, %v328
    %v331 = vmul.f32 %v329, %v329
    %v332 = vmul.f32 %v331, -0.001358992
    %v333 = vadd.f32 %v332, 0.041655596
    %v334 = vmul.f32 %v331, %v333
    %v335 = vadd.f32 %v334, -0.4999988
    %v336 = vmul.f32 %v331, %v335
    %v337 = vadd.f32 1.0, %v336
    %v338 = vmul.f32 %v329, %v329
    %v339 = vmul.f32 %v338, -0.00019511016
    %v340 = vadd.f32 %v339, 0.008332121
    %v341 = vmul.f32 %v338, %v340
    %v342 = vadd.f32 %v341, -0.16666654
    %v343 = vmul.f32 %v338, %v342
    %v344 = vadd.f32 %v343, 1.0
    %v345 = vmul.f32 %v344, %v329
    %vm346 = vweird.f32 %v195
    %v347 = vadd.s32 %v330, 3
    %v348 = vand.u32 %v347, 3
    %vm349 = vcmp.lt.s32.totalorder %v348, 2
    %vm350 = vcmp.eq.s32.totalorder %v348, 0
    %v351 = vxor.u32 %v345, 2147483648
    %v352 = vsel %vm350, %v337, %v351
    %vm353 = vcmp.eq.s32.totalorder %v348, 2
    %v354 = vxor.u32 %v337, 2147483648
    %v355 = vsel %vm353, %v354, %v345
    %v356 = vsel %vm349, %v352, %v355
    %v357 = vsel %vm346, nan, %v356
    %v358 = vand.u32 2147483647, %v202
    %vm359 = vcmp.le.f32.partialorder %v358, 0.7853982
    %vm360 = vcmp.lt.s32.totalorder %v202, 0
    %v361 = vand.u32 %v202, 2139095040
    %v362 = vshrl.u32 %v361, 23
    %v363 = vsub.s32 %v362, 127
    %v364 = vand.u32 2147483647, %v202
    %v365 = vand.u32 %v364, 8388607
    %v366 = vor.u32 %v365, 8388608
    %v367 = vsub.s32 0, %v366
    %v368 = vadd.s32 %v363, 1
    %vm369 = vcmp.gt.s32.totalorder %v368, 0
    %v370 = vsel %vm369, %v368, 0
    %v371 = vshrl.u32 %v370, 5
    %v372 = vand.u32 %v370, 31
    %v373 = vsub.s32 32, %v372
    %v374 = vshrl.u32 683565275, %v373
    %v375 = vshll.u32 683565275, %v372
    %v376 = vshrl.u32 2475754826, %v373
    %v377 = vor.u32 %v375, %v376
    %v378 = vshll.u32 2475754826, %v372
    %v379 = vshrl.u32 2131351028, %v373
    %v380 = vor.u32 %v378, %v379
    %v381 = vshll.u32 2131351028, %v372
    %v382 = vshrl.u32 2102212464, %v373
    %v383 = vor.u32 %v381, %v382
    %v384 = vshll.u32 2102212464, %v372
    %v385 = vshrl.u32 920167782, %v373
    %v386 = vor.u32 %v384, %v385
    %v387 = vshll.u32 920167782, %v372
    %v388 = vshrl.u32 1326507024, %v373
    %v389 = vor.u32 %v387, %v388
    %vm390 = vcmp.lt.s32.totalorder %v371, 1
    %vm391 = vcmp.lt.s32.totalorder %v371, 2
    %vm392 = vcmp.lt.s32.totalorder %v371, 3
    %vm393 = vcmp.lt.s32.totalorder %v371, 4
    %v394 = vsel %vm390, %v374, %v377
    %v395 = vsel %vm393, %v383, 2102212464
    %v396 = vsel %vm392, %v380, %v395
    %v397 = vsel %vm391, %v394, %v396
    %v398 = vsel %vm390, %v377, %v380
    %v399 = vsel %vm393, %v386, 920167782
    %v400 = vsel %vm392, %v383, %v399
    %v401 = vsel %vm391, %v398, %v400
    %v402 = vsel %vm390, %v380, %v383
    %v403 = vsel %vm393, %v389, 1326507024
    %v404 = vsel %vm392, %v386, %v403
    %v405 = vsel %vm391, %v402, %v404
    %v406 = vshll.u32 %v366, 8
    %v407 = vand.u32 %v406, 65535
    %v408 = vshrl.u32 %v406, 16
    %v409 = vand.u32 %v405, 65535
    %v410 = vshrl.u32 %v405, 16
    %v411 = vmul.u32 %v407, %v409
    %v412 = vmul.u32 %v407, %v410
    %v413 = vmul.u32 %v408, %v409
    %v414 = vmul.u32 %v408, %v410
    %v415 = vshll.u32 %v412, 16
    %v416 = vshrl.u32 %v412, 16
    %v417 = vshll.u32 %v413, 16
    %v418 = vshrl.u32 %v413, 16
    %vm419 = vc.u32 %v411, %v415
    %v420 = vsel %vm419, 1, 0
    %v421 = vadd.s32 %v411, %v415
    %v422 = vadd.s32 %v414, %v420
    %vm423 = vc.u32 %v421, %v417
    %v424 = vsel %vm423, 1, 0
    %v425 = vadd.s32 %v421, %v417
    %v426 = vadd.s32 %v422, %v424
    %v427 = vadd.s32 %v426, %v416
    %v428 = vadd.s32 %v427, %v418
    %v429 = vand.u32 %v406, 65535
    %v430 = vshrl.u32 %v406, 16
    %v431 = vand.u32 %v401, 65535
    %v432 = vshrl.u32 %v401, 16
    %v433 = vmul.u32 %v429, %v431
    %v434 = vmul.u32 %v429, %v432
    %v435 = vmul.u32 %v430, %v431
    %v436 = vmul.u32 %v430, %v432
    %v437 = vshll.u32 %v434, 16
    %v438 = vshrl.u32 %v434, 16
    %v439 = vshll.u32 %v435, 16
    %v440 = vshrl.u32 %v435, 16
    %vm441 = vc.u32 %v433, %v437
    %v442 = vsel %vm441, 1, 0
    %v443 = vadd.s32 %v433, %v437
    %v444 = vadd.s32 %v436, %v442
    %vm445 = vc.u32 %v443, %v439
    %v446 = vsel %vm445, 1, 0
    %v447 = vadd.s32 %v443, %v439
    %v448 = vadd.s32 %v444, %v446
    %v449 = vadd.s32 %v448, %v438
    %v450 = vadd.s32 %v449, %v440
    %v451 = vmul.u32 %v406, %v397
    %v452 = vadd.s32 %v428, %v447
    %vm453 = vc.u32 %v428, %v447
    %v454 = vadd.s32 %v450, 1
    %v455 = vsel %vm453, %v454, %v450
    %v456 = vadd.s32 %v451, %v455
    %v457 = vadd.s32 %v456, 536870912
    %v458 = vshrl.u32 %v457, 30
    %v459 = vshll.u32 %v458, 30
    %v460 = vsub.s32 %v456, %v459
    %vm461 = vcmp.lt.s32.totalorder %v460, 0
    %v462 = vsub.s32 0, %v460
    %v463 = vsel %vm461, %v462, %v460
    %v464 = vclz %v463
    %v465 = vsub.s32 %v464, 2
    %vm466 = vcmp.gt.s32.totalorder 0, %v465
    %v467 = vsel %vm466, 0, %v465
    %v468 = vsub.s32 32, %v467
    %v469 = vshll.u32 %v460, %v467
    %v470 = vshrl.u32 %v452, %v468
    %v471 = vor.u32 %v469, %v470
    %v472 = vsub.s32 4294967266, %v467
    %v473 = vadd.s32 %v472, 127
    %v474 = vshll.u32 %v473, 23
    %v475 = vor.u32 4788187, %v474
    %v476 = vand.u32 2147483647, %v475
    %v478 = vcvt.s32.f32 %v471
    %v479 = vmul.f32 %v478, %v476
    %v480 = vxor.u32 %v479, 2147483648
    %v481 = vsel %vm360, %v480, %v479
    %v482 = vsub.s32 4, %v458
    %v483 = vsel %vm360, %v482, %v458
    %v484 = vsel %vm359, %v202, %v481
    %v485 = vsel %vm359, 0, %v483
    %v486 = vmul.f32 %v484, %v484
    %v487 = vmul.f32 %v486, -0.001358992
    %v488 = vadd.f32 %v487, 0.041655596
    %v489 = vmul.f32 %v486, %v488
    %v490 = vadd.f32 %v489, -0.4999988
    %v491 = vmul.f32 %v486, %v490
    %v492 = vadd.f32 1.0, %v491
    %v493 = vmul.f32 %v484, %v484
    %v494 = vmul.f32 %v493, -0.00019511016
    %v495 = vadd.f32 %v494, 0.008332121
    %v496 = vmul.f32 %v493, %v495
    %v497 = vadd.f32 %v496, -0.16666654
    %v498 = vmul.f32 %v493, %v497
    %v499 = vadd.f32 %v498, 1.0
    %v500 = vmul.f32 %v499, %v484
    %vm501 = vweird.f32 %v202
    %v502 = vadd.s32 %v485, 3
    %v503 = vand.u32 %v502, 3
    %vm504 = vcmp.lt.s32.totalorder %v503, 2
    %vm505 = vcmp.eq.s32.totalorder %v503, 0
    %v506 = vxor.u32 %v500, 2147483648
    %v507 = vsel %vm505, %v492, %v506
    %vm508 = vcmp.eq.s32.totalorder %v503, 2
    %v509 = vxor.u32 %v492, 2147483648
    %v510 = vsel %vm508, %v509, %v500
    %v511 = vsel %vm504, %v507, %v510
    %v512 = vsel %vm501, nan, %v511
    %v513 = vand.u32 2147483647, %v195
    %vm514 = vcmp.le.f32.partialorder %v513, 0.7853982
    %vm515 = vcmp.lt.s32.totalorder %v195, 0
    %v516 = vand.u32 %v195, 2139095040
    %v517 = vshrl.u32 %v516, 23
    %v518 = vsub.s32 %v517, 127
    %v519 = vand.u32 2147483647, %v195
    %v520 = vand.u32 %v519, 8388607
    %v521 = vor.u32 %v520, 8388608
    %v522 = vsub.s32 0, %v521
    %v523 = vadd.s32 %v518, 1
    %vm524 = vcmp.gt.s32.totalorder %v523, 0
    %v525 = vsel %vm524, %v523, 0
    %v526 = vshrl.u32 %v525, 5
    %v527 = vand.u32 %v525, 31
    %v528 = vsub.s32 32, %v527
    %v529 = vshrl.u32 683565275, %v528
    %v530 = vshll.u32 683565275, %v527
    %v531 = vshrl.u32 2475754826, %v528
    %v532 = vor.u32 %v530, %v531
    %v533 = vshll.u32 2475754826, %v527
    %v534 = vshrl.u32 2131351028, %v528
    %v535 = vor.u32 %v533, %v534
    %v536 = vshll.u32 2131351028, %v527
    %v537 = vshrl.u32 2102212464, %v528
    %v538 = vor.u32 %v536, %v537
    %v539 = vshll.u32 2102212464, %v527
    %v540 = vshrl.u32 920167782, %v528
    %v541 = vor.u32 %v539, %v540
    %v542 = vshll.u32 920167782, %v527
    %v543 = vshrl.u32 1326507024, %v528
    %v544 = vor.u32 %v542, %v543
    %vm545 = vcmp.lt.s32.totalorder %v526, 1
    %vm546 = vcmp.lt.s32.totalorder %v526, 2
    %vm547 = vcmp.lt.s32.totalorder %v526, 3
    %vm548 = vcmp.lt.s32.totalorder %v526, 4
    %v549 = vsel %vm545, %v529, %v532
    %v550 = vsel %vm548, %v538, 2102212464
    %v551 = vsel %vm547, %v535, %v550
    %v552 = vsel %vm546, %v549, %v551
    %v553 = vsel %vm545, %v532, %v535
    %v554 = vsel %vm548, %v541, 920167782
    %v555 = vsel %vm547, %v538, %v554
    %v556 = vsel %vm546, %v553, %v555
    %v557 = vsel %vm545, %v535, %v538
    %v558 = vsel %vm548, %v544, 1326507024
    %v559 = vsel %vm547, %v541, %v558
    %v560 = vsel %vm546, %v557, %v559
    %v561 = vshll.u32 %v521, 8
    %v562 = vand.u32 %v561, 65535
    %v563 = vshrl.u32 %v561, 16
    %v564 = vand.u32 %v560, 65535
    %v565 = vshrl.u32 %v560, 16
    %v566 = vmul.u32 %v562, %v564
    %v567 = vmul.u32 %v562, %v565
    %v568 = vmul.u32 %v563, %v564
    %v569 = vmul.u32 %v563, %v565
    %v570 = vshll.u32 %v567, 16
    %v571 = vshrl.u32 %v567, 16
    %v572 = vshll.u32 %v568, 16
    %v573 = vshrl.u32 %v568, 16
    %vm574 = vc.u32 %v566, %v570
    %v575 = vsel %vm574, 1, 0
    %v576 = vadd.s32 %v566, %v570
    %v577 = vadd.s32 %v569, %v575
    %vm578 = vc.u32 %v576, %v572
    %v579 = vsel %vm578, 1, 0
    %v580 = vadd.s32 %v576, %v572
    %v581 = vadd.s32 %v577, %v579
    %v582 = vadd.s32 %v581, %v571
    %v583 = vadd.s32 %v582, %v573
    %v584 = vand.u32 %v561, 65535
    %v585 = vshrl.u32 %v561, 16
    %v586 = vand.u32 %v556, 65535
    %v587 = vshrl.u32 %v556, 16
    %v588 = vmul.u32 %v584, %v586
    %v589 = vmul.u32 %v584, %v587
    %v590 = vmul.u32 %v585, %v586
    %v591 = vmul.u32 %v585, %v587
    %v592 = vshll.u32 %v589, 16
    %v593 = vshrl.u32 %v589, 16
    %v594 = vshll.u32 %v590, 16
    %v595 = vshrl.u32 %v590, 16
    %vm596 = vc.u32 %v588, %v592
    %v597 = vsel %vm596, 1, 0
    %v598 = vadd.s32 %v588, %v592
    %v599 = vadd.s32 %v591, %v597
    %vm600 = vc.u32 %v598, %v594
    %v601 = vsel %vm600, 1, 0
    %v602 = vadd.s32 %v598, %v594
    %v603 = vadd.s32 %v599, %v601
    %v604 = vadd.s32 %v603, %v593
    %v605 = vadd.s32 %v604, %v595
    %v606 = vmul.u32 %v561, %v552
    %v607 = vadd.s32 %v583, %v602
    %vm608 = vc.u32 %v583, %v602
    %v609 = vadd.s32 %v605, 1
    %v610 = vsel %vm608, %v609, %v605
    %v611 = vadd.s32 %v606, %v610
    %v612 = vadd.s32 %v611, 536870912
    %v613 = vshrl.u32 %v612, 30
    %v614 = vshll.u32 %v613, 30
    %v615 = vsub.s32 %v611, %v614
    %vm616 = vcmp.lt.s32.totalorder %v615, 0
    %v617 = vsub.s32 0, %v615
    %v618 = vsel %vm616, %v617, %v615
    %v619 = vclz %v618
    %v620 = vsub.s32 %v619, 2
    %vm621 = vcmp.gt.s32.totalorder 0, %v620
    %v622 = vsel %vm621, 0, %v620
    %v623 = vsub.s32 32, %v622
    %v624 = vshll.u32 %v615, %v622
    %v625 = vshrl.u32 %v607, %v623
    %v626 = vor.u32 %v624, %v625
    %v627 = vsub.s32 4294967266, %v622
    %v628 = vadd.s32 %v627, 127
    %v629 = vshll.u32 %v628, 23
    %v630 = vor.u32 4788187, %v629
    %v631 = vand.u32 2147483647, %v630
    %v633 = vcvt.s32.f32 %v626
    %v634 = vmul.f32 %v633, %v631
    %v635 = vxor.u32 %v634, 2147483648
    %v636 = vsel %vm515, %v635, %v634
    %v637 = vsub.s32 4, %v613
    %v638 = vsel %vm515, %v637, %v613
    %v639 = vsel %vm514, %v195, %v636
    %v640 = vsel %vm514, 0, %v638
    %v641 = vmul.f32 %v639, %v639
    %v642 = vmul.f32 %v641, -0.001358992
    %v643 = vadd.f32 %v642, 0.041655596
    %v644 = vmul.f32 %v641, %v643
    %v645 = vadd.f32 %v644, -0.4999988
    %v646 = vmul.f32 %v641, %v645
    %v647 = vadd.f32 1.0, %v646
    %v648 = vmul.f32 %v639, %v639
    %v649 = vmul.f32 %v648, -0.00019511016
    %v650 = vadd.f32 %v649, 0.008332121
    %v651 = vmul.f32 %v648, %v650
    %v652 = vadd.f32 %v651, -0.16666654
    %v653 = vmul.f32 %v648, %v652
    %v654 = vadd.f32 %v653, 1.0
    %v655 = vmul.f32 %v654, %v639
    %vm656 = vweird.f32 %v195
    %v657 = vand.u32 %v640, 3
    %vm658 = vcmp.lt.s32.totalorder %v657, 2
    %vm659 = vcmp.eq.s32.totalorder %v657, 0
    %v660 = vxor.u32 %v655, 2147483648
    %v661 = vsel %vm659, %v647, %v660
    %vm662 = vcmp.eq.s32.totalorder %v657, 2
    %v663 = vxor.u32 %v647, 2147483648
    %v664 = vsel %vm662, %v663, %v655
    %v665 = vsel %vm658, %v661, %v664
    %v666 = vsel %vm656, nan, %v665
    %v667 = vand.u32 2147483647, %v202
    %vm668 = vcmp.le.f32.partialorder %v667, 0.7853982
    %vm669 = vcmp.lt.s32.totalorder %v202, 0
    %v670 = vand.u32 %v202, 2139095040
    %v671 = vshrl.u32 %v670, 23
    %v672 = vsub.s32 %v671, 127
    %v673 = vand.u32 2147483647, %v202
    %v674 = vand.u32 %v673, 8388607
    %v675 = vor.u32 %v674, 8388608
    %v676 = vsub.s32 0, %v675
    %v677 = vadd.s32 %v672, 1
    %vm678 = vcmp.gt.s32.totalorder %v677, 0
    %v679 = vsel %vm678, %v677, 0
    %v680 = vshrl.u32 %v679, 5
    %v681 = vand.u32 %v679, 31
    %v682 = vsub.s32 32, %v681
    %v683 = vshrl.u32 683565275, %v682
    %v684 = vshll.u32 683565275, %v681
    %v685 = vshrl.u32 2475754826, %v682
    %v686 = vor.u32 %v684, %v685
    %v687 = vshll.u32 2475754826, %v681
    %v688 = vshrl.u32 2131351028, %v682
    %v689 = vor.u32 %v687, %v688
    %v690 = vshll.u32 2131351028, %v681
    %v691 = vshrl.u32 2102212464, %v682
    %v692 = vor.u32 %v690, %v691
    %v693 = vshll.u32 2102212464, %v681
    %v694 = vshrl.u32 920167782, %v682
    %v695 = vor.u32 %v693, %v694
    %v696 = vshll.u32 920167782, %v681
    %v697 = vshrl.u32 1326507024, %v682
    %v698 = vor.u32 %v696, %v697
    %vm699 = vcmp.lt.s32.totalorder %v680, 1
    %vm700 = vcmp.lt.s32.totalorder %v680, 2
    %vm701 = vcmp.lt.s32.totalorder %v680, 3
    %vm702 = vcmp.lt.s32.totalorder %v680, 4
    %v703 = vsel %vm699, %v683, %v686
    %v704 = vsel %vm702, %v692, 2102212464
    %v705 = vsel %vm701, %v689, %v704
    %v706 = vsel %vm700, %v703, %v705
    %v707 = vsel %vm699, %v686, %v689
    %v708 = vsel %vm702, %v695, 920167782
    %v709 = vsel %vm701, %v692, %v708
    %v710 = vsel %vm700, %v707, %v709
    %v711 = vsel %vm699, %v689, %v692
    %v712 = vsel %vm702, %v698, 1326507024
    %v713 = vsel %vm701, %v695, %v712
    %v714 = vsel %vm700, %v711, %v713
    %v715 = vshll.u32 %v675, 8
    %v716 = vand.u32 %v715, 65535
    %v717 = vshrl.u32 %v715, 16
    %v718 = vand.u32 %v714, 65535
    %v719 = vshrl.u32 %v714, 16
    %v720 = vmul.u32 %v716, %v718
    %v721 = vmul.u32 %v716, %v719
    %v722 = vmul.u32 %v717, %v718
    %v723 = vmul.u32 %v717, %v719
    %v724 = vshll.u32 %v721, 16
    %v725 = vshrl.u32 %v721, 16
    %v726 = vshll.u32 %v722, 16
    %v727 = vshrl.u32 %v722, 16
    %vm728 = vc.u32 %v720, %v724
    %v729 = vsel %vm728, 1, 0
    %v730 = vadd.s32 %v720, %v724
    %v731 = vadd.s32 %v723, %v729
    %vm732 = vc.u32 %v730, %v726
    %v733 = vsel %vm732, 1, 0
    %v734 = vadd.s32 %v730, %v726
    %v735 = vadd.s32 %v731, %v733
    %v736 = vadd.s32 %v735, %v725
    %v737 = vadd.s32 %v736, %v727
    %v738 = vand.u32 %v715, 65535
    %v739 = vshrl.u32 %v715, 16
    %v740 = vand.u32 %v710, 65535
    %v741 = vshrl.u32 %v710, 16
    %v742 = vmul.u32 %v738, %v740
    %v743 = vmul.u32 %v738, %v741
    %v744 = vmul.u32 %v739, %v740
    %v745 = vmul.u32 %v739, %v741
    %v746 = vshll.u32 %v743, 16
    %v747 = vshrl.u32 %v743, 16
    %v748 = vshll.u32 %v744, 16
    %v749 = vshrl.u32 %v744, 16
    %vm750 = vc.u32 %v742, %v746
    %v751 = vsel %vm750, 1, 0
    %v752 = vadd.s32 %v742, %v746
    %v753 = vadd.s32 %v745, %v751
    %vm754 = vc.u32 %v752, %v748
    %v755 = vsel %vm754, 1, 0
    %v756 = vadd.s32 %v752, %v748
    %v757 = vadd.s32 %v753, %v755
    %v758 = vadd.s32 %v757, %v747
    %v759 = vadd.s32 %v758, %v749
    %v760 = vmul.u32 %v715, %v706
    %v761 = vadd.s32 %v737, %v756
    %vm762 = vc.u32 %v737, %v756
    %v763 = vadd.s32 %v759, 1
    %v764 = vsel %vm762, %v763, %v759
    %v765 = vadd.s32 %v760, %v764
    %v766 = vadd.s32 %v765, 536870912
    %v767 = vshrl.u32 %v766, 30
    %v768 = vshll.u32 %v767, 30
    %v769 = vsub.s32 %v765, %v768
    %vm770 = vcmp.lt.s32.totalorder %v769, 0
    %v771 = vsub.s32 0, %v769
    %v772 = vsel %vm770, %v771, %v769
    %v773 = vclz %v772
    %v774 = vsub.s32 %v773, 2
    %vm775 = vcmp.gt.s32.totalorder 0, %v774
    %v776 = vsel %vm775, 0, %v774
    %v777 = vsub.s32 32, %v776
    %v778 = vshll.u32 %v769, %v776
    %v779 = vshrl.u32 %v761, %v777
    %v780 = vor.u32 %v778, %v779
    %v781 = vsub.s32 4294967266, %v776
    %v782 = vadd.s32 %v781, 127
    %v783 = vshll.u32 %v782, 23
    %v784 = vor.u32 4788187, %v783
    %v785 = vand.u32 2147483647, %v784
    %v787 = vcvt.s32.f32 %v780
    %v788 = vmul.f32 %v787, %v785
    %v789 = vxor.u32 %v788, 2147483648
    %v790 = vsel %vm669, %v789, %v788
    %v791 = vsub.s32 4, %v767
    %v792 = vsel %vm669, %v791, %v767
    %v793 = vsel %vm668, %v202, %v790
    %v794 = vsel %vm668, 0, %v792
    %v795 = vmul.f32 %v793, %v793
    %v796 = vmul.f32 %v795, -0.001358992
    %v797 = vadd.f32 %v796, 0.041655596
    %v798 = vmul.f32 %v795, %v797
    %v799 = vadd.f32 %v798, -0.4999988
    %v800 = vmul.f32 %v795, %v799
    %v801 = vadd.f32 1.0, %v800
    %v802 = vmul.f32 %v793, %v793
    %v803 = vmul.f32 %v802, -0.00019511016
    %v804 = vadd.f32 %v803, 0.008332121
    %v805 = vmul.f32 %v802, %v804
    %v806 = vadd.f32 %v805, -0.16666654
    %v807 = vmul.f32 %v802, %v806
    %v808 = vadd.f32 %v807, 1.0
    %v809 = vmul.f32 %v808, %v793
    %vm810 = vweird.f32 %v202
    %v811 = vand.u32 %v794, 3
    %vm812 = vcmp.lt.s32.totalorder %v811, 2
    %vm813 = vcmp.eq.s32.totalorder %v811, 0
    %v814 = vxor.u32 %v809, 2147483648
    %v815 = vsel %vm813, %v801, %v814
    %vm816 = vcmp.eq.s32.totalorder %v811, 2
    %v817 = vxor.u32 %v801, 2147483648
    %v818 = vsel %vm816, %v817, %v809
    %v819 = vsel %vm812, %v815, %v818
    %v820 = vsel %vm810, nan, %v819
    %822 = vrot.lane.b32.xlu0 %v666, 16
    %v823 = vpop.permute.xlu0 %822
    %826 = vrot.lane.b32.xlu0 %v357, 16
    %v827 = vpop.permute.xlu0 %826
    %829 = vrot.lane.b32.xlu0 %v666, 32
    %v830 = vpop.permute.xlu0 %829
    %832 = vrot.lane.b32.xlu0 %v357, 32
    %v833 = vpop.permute.xlu0 %832
    %835 = vrot.lane.b32.xlu0 %v666, 48
    %v836 = vpop.permute.xlu0 %835
    %838 = vrot.lane.b32.xlu0 %v357, 48
    %v839 = vpop.permute.xlu0 %838
    %841 = vrot.lane.b32.xlu0 %v666, 64
    %v842 = vpop.permute.xlu0 %841
    %844 = vrot.lane.b32.xlu0 %v357, 64
    %v845 = vpop.permute.xlu0 %844
    %847 = vrot.lane.b32.xlu0 %v666, 80
    %v848 = vpop.permute.xlu0 %847
    %850 = vrot.lane.b32.xlu0 %v357, 80
    %v851 = vpop.permute.xlu0 %850
    %853 = vrot.lane.b32.xlu0 %v666, 96
    %v854 = vpop.permute.xlu0 %853
    %856 = vrot.lane.b32.xlu0 %v357, 96
    %v857 = vpop.permute.xlu0 %856
    %859 = vrot.lane.b32.xlu0 %v666, 112
    %v860 = vpop.permute.xlu0 %859
    %862 = vrot.lane.b32.xlu0 %v357, 112
    %v863 = vpop.permute.xlu0 %862
    %v865 = vsel %vm182, %v357, %v823
    %v866 = vsel %vm184, %v865, %v827
    %v867 = vsel %vm186, %v866, %v830
    %v868 = vsel %vm188, %v867, %v833
    %v869 = vsel %vm190, %v868, %v836
    %v870 = vsel %vm192, %v869, %v839
    %v871 = vsel %vm194, %v870, %v842
    %v872 = vsel %vm182, %v845, %v848
    %v873 = vsel %vm184, %v872, %v851
    %v874 = vsel %vm186, %v873, %v854
    %v875 = vsel %vm188, %v874, %v857
    %v876 = vsel %vm190, %v875, %v860
    %v877 = vsel %vm192, %v876, %v863
    %v878 = vsel %vm194, %v877, %v666
    %880 = vrot.lane.b32.xlu0 %v820, 16
    %v881 = vpop.permute.xlu0 %880
    %884 = vrot.lane.b32.xlu0 %v512, 16
    %v885 = vpop.permute.xlu0 %884
    %887 = vrot.lane.b32.xlu0 %v820, 32
    %v888 = vpop.permute.xlu0 %887
    %890 = vrot.lane.b32.xlu0 %v512, 32
    %v891 = vpop.permute.xlu0 %890
    %893 = vrot.lane.b32.xlu0 %v820, 48
    %v894 = vpop.permute.xlu0 %893
    %896 = vrot.lane.b32.xlu0 %v512, 48
    %v897 = vpop.permute.xlu0 %896
    %899 = vrot.lane.b32.xlu0 %v820, 64
    %v900 = vpop.permute.xlu0 %899
    %902 = vrot.lane.b32.xlu0 %v512, 64
    %v903 = vpop.permute.xlu0 %902
    %905 = vrot.lane.b32.xlu0 %v820, 80
    %v906 = vpop.permute.xlu0 %905
    %908 = vrot.lane.b32.xlu0 %v512, 80
    %v909 = vpop.permute.xlu0 %908
    %911 = vrot.lane.b32.xlu0 %v820, 96
    %v912 = vpop.permute.xlu0 %911
    %914 = vrot.lane.b32.xlu0 %v512, 96
    %v915 = vpop.permute.xlu0 %914
    %917 = vrot.lane.b32.xlu0 %v820, 112
    %v918 = vpop.permute.xlu0 %917
    %920 = vrot.lane.b32.xlu0 %v512, 112
    %v921 = vpop.permute.xlu0 %920
    %v923 = vsel %vm182, %v512, %v881
    %v924 = vsel %vm184, %v923, %v885
    %v925 = vsel %vm186, %v924, %v888
    %v926 = vsel %vm188, %v925, %v891
    %v927 = vsel %vm190, %v926, %v894
    %v928 = vsel %vm192, %v927, %v897
    %v929 = vsel %vm194, %v928, %v900
    %v930 = vsel %vm182, %v903, %v906
    %v931 = vsel %vm184, %v930, %v909
    %v932 = vsel %vm186, %v931, %v912
    %v933 = vsel %vm188, %v932, %v915
    %v934 = vsel %vm190, %v933, %v918
    %v935 = vsel %vm192, %v934, %v921
    %v936 = vsel %vm194, %v935, %v820
    %937 = vst [vmem:[#allocation7] sm:$0xff] %v871
    %938 = vst [vmem:[#allocation7 + $0x8] sm:$0xff] %v878
    %939 = vst [vmem:[#allocation7 + $0x10] sm:$0xff] %v929
    %940 = vst [vmem:[#allocation7 + $0x18] sm:$0xff] %v936
    // Predicated region
    $region18: #{tpu_custom_call.1} parent=1 // pred_check
      _
    $region19: #{tpu_custom_call.1} parent=1 // pred_check_branch
      %942 = sbr.rel (0) target = $region21
    $region20: #{tpu_custom_call.1} parent=1 // pred_region
      %944 = vsyncadd [#allocation4], 0
      %s946 = sshll.u32 [#allocation7], 4
      %s947 = int_to_ptr.vmem [resolvable:$true] %s946
      %s948 = sshll.u32 %s2, 4
      %s949 = int_to_ptr.hbm [resolvable:$true] %s948
      %951 = dma.vmem_to_hbm [thread:$0]  %s947, 512, %s949, [#allocation4]
    $region21: #{tpu_custom_call.1} parent=1 // pred_fallthru
      _
    // Predicated region
    $region22: #{tpu_custom_call.1} parent=1 // pred_check
      _
    $region23: #{tpu_custom_call.1} parent=1 // pred_check_branch
      %953 = sbr.rel (0) target = $region25
    $region24: #{tpu_custom_call.1} parent=1 // pred_region
      %955 = dma.done [#allocation4], 512
    $region25: #{tpu_custom_call.1} parent=1 // pred_fallthru
      _
    %956 = vsyncpa [#allocation3], 1
    %957 = vsyncpa [#allocation6], 1
    %958 = vsyncpa [#allocation4], 1

</llo_original>
